<compile_context>
chip_gen: v7x
topology: tpu7x:2x2x1
jax: 0.10.0
libtpu: 0.0.40
codegen_flags: <defaults>
</compile_context>

<pallas_src>
import functools
import numpy as np

import jax
import jax.numpy as jnp
from jax.experimental import pallas as pl
from jax.experimental.pallas import tpu as pltpu

LANE = 128


def _round_up(x, m):
    return (x + m - 1) // m * m


def _textcnn_kernel(emb_ref, w_ref, bias_ref, mask_ref, fcw_ref, fcb_ref, out_ref):
    """One batch tile: per-tap conv-as-matmul + ReLU + max-over-time + FC."""
    TB = out_ref.shape[0]                  # batch tile (multiple of 8)
    NFP = bias_ref.shape[1]                # 128-wide feature slab
    L = mask_ref.shape[0]                  # original sequence length
    C = w_ref.shape[1]                     # max_fs * NFP
    max_fs = C // NFP
    rows = emb_ref.shape[0]                # TB * L_pad
    L_pad = rows // TB                     # time-padded length (multiple of 8)

    emb = emb_ref[...]                     # (rows, E_tot) bf16, merged stream
    w = w_ref[...]                         # (E_tot, max_fs*128) bf16

    # Per-tap conv matmul + shifted accumulate.  Tap r of every filter lives in
    # its own lane-aligned 128-wide block of `w`, so each pass is one
    # (rows, E_tot) x (E_tot, 128) MXU matmul with f32 accumulation; only a
    # (TB, L, 128) f32 accumulator (plus one tap result) is ever live instead of
    # the full (rows, max_fs*128) slab.
    def tap(r):
        y = jnp.dot(emb, w[:, r * NFP:(r + 1) * NFP],
                    preferred_element_type=jnp.float32)
        # conv[b, t, :] += y[b, t + r, :]; time was zero-padded to >= L+max_fs-1
        # in the wrapper, so the shifted read never leaves this batch tile.
        return y.reshape(TB, L_pad, NFP)[:, r:r + L, :]

    conv = tap(0)
    for r in range(1, max_fs):
        conv = conv + tap(r)

    # Bias added once (not per time step) + ReLU, then zero out conv positions
    # that are invalid for a given filter size, then max-pool over time
    # (mask-then-max is valid because ReLU output is >= 0).
    act = jnp.maximum(conv + bias_ref[...], 0.0) * mask_ref[...]
    pooled = jnp.max(act, axis=1)          # (TB, 128) lane-dense features

    # TODO(synk): dropout is identity here (eval-mode nn.Dropout semantics).

    # Final FC on the same lane-dense slab: (TB, 128) x (128, 128).
    logits = jnp.dot(pooled.astype(jnp.bfloat16), fcw_ref[...],
                     preferred_element_type=jnp.float32)
    out_ref[...] = logits + fcb_ref[...]


def pack_textcnn_params(params, *, sequence_length, num_classes,
                        text_embedding_size, pos_embedding_size,
                        filter_sizes, num_filters):
    """Reorganize PyTorch-layout weights into lane-dense Pallas slabs (done once)."""
    L = sequence_length
    E_t, E_p = text_embedding_size, pos_embedding_size
    E_tot = E_t + 2 * E_p
    NF = num_filters
    NF_total = NF * len(filter_sizes)
    max_fs = max(filter_sizes)
    assert NF_total <= LANE and num_classes <= LANE
    NFP = LANE                              # padded feature-slab width
    NCP = LANE                              # padded class width
    C = max_fs * NFP

    # Single merged conv weight: tap r of filter f of size-group k sits at
    # column r*128 + k*NF + f; zero columns for r >= fs_k.
    w_conv = np.zeros((E_tot, C), np.float32)
    bias = np.zeros((1, NFP), np.float32)
    mask = np.zeros((L, NFP), np.float32)
    for k, fs in enumerate(filter_sizes):
        w = np.asarray(params[f"conv_w_{k}"], np.float32)[:, 0]   # (NF, fs, E_tot)
        b = np.asarray(params[f"conv_b_{k}"], np.float32)         # (NF,)
        c0 = k * NF
        for r in range(fs):
            w_conv[:, r * NFP + c0:r * NFP + c0 + NF] = w[:, r, :].T
        bias[0, c0:c0 + NF] = b
        mask[:max(L - fs + 1, 0), c0:c0 + NF] = 1.0               # valid conv positions

    fcw = np.zeros((NFP, NCP), np.float32)
    fcb = np.zeros((1, NCP), np.float32)
    fcw[:NF_total, :num_classes] = np.asarray(params["fc_w"], np.float32).T
    fcb[0, :num_classes] = np.asarray(params["fc_b"], np.float32)

    return {
        # Embedding tables stored in bf16 so the gathers already produce bf16.
        "W_text": jnp.asarray(params["W_text"], jnp.bfloat16),
        "W_position": jnp.asarray(params["W_position"], jnp.bfloat16),
        "conv_w": jnp.asarray(w_conv, jnp.bfloat16),
        "conv_bias": jnp.asarray(bias, jnp.float32),
        "time_mask": jnp.asarray(mask, jnp.float32),
        "fc_w": jnp.asarray(fcw, jnp.bfloat16),
        "fc_b": jnp.asarray(fcb, jnp.float32),
    }


@functools.partial(jax.jit, static_argnames=(
    "sequence_length", "num_classes", "filter_sizes", "num_filters", "batch_tile"))
def textcnn_forward(text, pos1, pos2, packed, *, sequence_length, num_classes,
                    filter_sizes, num_filters, batch_tile=128):
    L = sequence_length
    max_fs = max(filter_sizes)
    L_pad = _round_up(L + max_fs - 1, 8)        # zero-padded time, sublane-aligned
    B = text.shape[0]

    # Batch tiling: large tiles amortize the ~0.35us/step grid overhead and fill
    # the MXU M dimension; when the whole batch fits one tile but is big enough,
    # split it into two tiles so both v7x TensorCores get work.
    B8 = _round_up(B, 8)
    TB = min(batch_tile, B8)
    if B8 <= TB and B8 >= 16:
        TB = _round_up((B8 + 1) // 2, 8)
    B_pad = _round_up(B8, TB)
    n_tiles = B_pad // TB

    # Glue: embedding gathers + one concat -> a single merged bf16 stream.
    # TODO(synk): for tiny vocabularies the embedding tables could be folded into
    # the conv weights offline and gathered in-kernel from VMEM (indices-only HBM
    # traffic); kept as XLA gathers since realistic vocab sizes make the folded
    # (vocab, max_fs*128) table HBM-resident and need per-token gather DMA.
    te = jnp.take(packed["W_text"], text, axis=0)        # (B, L, E_text)
    p1 = jnp.take(packed["W_position"], pos1, axis=0)    # (B, L, E_pos)
    p2 = jnp.take(packed["W_position"], pos2, axis=0)    # (B, L, E_pos)
    emb = jnp.concatenate([te, p1, p2], axis=-1)         # (B, L, E_tot) bf16
    emb = jnp.pad(emb, ((0, B_pad - B), (0, L_pad - L), (0, 0)))
    E_tot = emb.shape[-1]
    emb = emb.reshape(B_pad * L_pad, E_tot)              # flat rows for the matmul

    NFP = packed["conv_bias"].shape[1]
    NCP = packed["fc_w"].shape[1]
    C = packed["conv_w"].shape[1]
    rows_tile = TB * L_pad

    # Explicit VMEM budget (v5e default scoped limit is 16 MiB; v7x physical VMEM
    # is only 64 MiB): double-buffered inputs/weights + f32 tap/accum temporaries.
    est = (2 * rows_tile * E_tot * 2            # embeds block, bf16, double buffer
           + 2 * E_tot * C * 2                  # conv weight, bf16
           + 2 * NFP * NCP * 2                  # fc weight, bf16
           + (max_fs + 2) * rows_tile * NFP * 4 # f32 tap results / accumulator
           + (1 << 20))
    vmem_limit = None
    if 2 * est > (16 << 20):
        vmem_limit = int(min(max(2 * est, 32 << 20), 64 << 20))

    out = pl.pallas_call(
        _textcnn_kernel,
        out_shape=jax.ShapeDtypeStruct((B_pad, NCP), jnp.float32),
        grid=(n_tiles,),
        in_specs=[
            pl.BlockSpec((rows_tile, E_tot), lambda i: (i, 0)),
            pl.BlockSpec((E_tot, C), lambda i: (0, 0)),
            pl.BlockSpec((1, NFP), lambda i: (0, 0)),
            pl.BlockSpec((L, NFP), lambda i: (0, 0)),
            pl.BlockSpec((NFP, NCP), lambda i: (0, 0)),
            pl.BlockSpec((1, NCP), lambda i: (0, 0)),
        ],
        out_specs=pl.BlockSpec((TB, NCP), lambda i: (i, 0)),
        compiler_params=pltpu.CompilerParams(
            dimension_semantics=("parallel",),
            vmem_limit_bytes=vmem_limit),
    )(emb, packed["conv_w"], packed["conv_bias"], packed["time_mask"],
      packed["fc_w"], packed["fc_b"])

    return out[:B, :num_classes]


def textcnn_reference(text, pos1, pos2, params, filter_sizes):
    """Pure-JAX f32 reference matching the PyTorch module (eval mode)."""
    te = jnp.take(params["W_text"], text, axis=0)
    p1 = jnp.take(params["W_position"], pos1, axis=0)
    p2 = jnp.take(params["W_position"], pos2, axis=0)
    embeds = jnp.concatenate([te, p1, p2], axis=-1)          # (B, L, E)
    L = embeds.shape[1]
    feats = []
    for k, fs in enumerate(filter_sizes):
        w = params[f"conv_w_{k}"][:, 0]                      # (NF, fs, E)
        b = params[f"conv_b_{k}"]                            # (NF,)
        outs = []
        for t in range(L - fs + 1):
            window = embeds[:, t:t + fs, :]                  # (B, fs, E)
            outs.append(jnp.einsum("bre,fre->bf", window, w) + b)
        h = jax.nn.relu(jnp.stack(outs, axis=-1))            # (B, NF, Lout)
        feats.append(jnp.max(h, axis=-1))                    # (B, NF)
    feat = jnp.concatenate(feats, axis=1)
    return feat @ params["fc_w"].T + params["fc_b"]


if __name__ == "__main__":
    # Small, module-consistent shapes.
    B = 2
    sequence_length = 16
    num_classes = 8
    text_vocab_size = 50
    text_embedding_size = 16
    pos_vocab_size = 20
    pos_embedding_size = 8
    filter_sizes = (3, 4)
    num_filters = 16

    E = text_embedding_size + 2 * pos_embedding_size          # 32

    key = jax.random.PRNGKey(0)
    keys = jax.random.split(key, 12)

    params = {
        "W_text": 0.1 * jax.random.normal(
            keys[0], (text_vocab_size, text_embedding_size), jnp.float32),
        "W_position": 0.1 * jax.random.normal(
            keys[1], (pos_vocab_size, pos_embedding_size), jnp.float32),
        # PyTorch Linear weight layout: (out_features, in_features).
        "fc_w": 0.1 * jax.random.normal(
            keys[2], (num_classes, num_filters * len(filter_sizes)), jnp.float32),
        "fc_b": 0.01 * jax.random.normal(keys[3], (num_classes,), jnp.float32),
    }
    for k, fs in enumerate(filter_sizes):
        # PyTorch Conv2d(1, NF, (fs, E)) weight layout: (NF, 1, fs, E).
        params[f"conv_w_{k}"] = 0.1 * jax.random.normal(
            keys[4 + k], (num_filters, 1, fs, E), jnp.float32)
        params[f"conv_b_{k}"] = 0.01 * jax.random.normal(
            keys[6 + k], (num_filters,), jnp.float32)

    packed = pack_textcnn_params(
        params, sequence_length=sequence_length, num_classes=num_classes,
        text_embedding_size=text_embedding_size,
        pos_embedding_size=pos_embedding_size,
        filter_sizes=filter_sizes, num_filters=num_filters)

    text = jax.random.randint(keys[8], (B, sequence_length), 0, text_vocab_size)
    pos1 = jax.random.randint(keys[9], (B, sequence_length), 0, pos_vocab_size)
    pos2 = jax.random.randint(keys[10], (B, sequence_length), 0, pos_vocab_size)

    logits = textcnn_forward(
        text, pos1, pos2, packed, sequence_length=sequence_length,
        num_classes=num_classes, filter_sizes=filter_sizes,
        num_filters=num_filters)
    jax.block_until_ready(logits)
    assert logits.shape == (B, num_classes)

    # Numerical sanity check vs f32 reference (bf16 matmul operands -> loose atol).
    ref = textcnn_reference(text, pos1, pos2, params, filter_sizes)
    np.testing.assert_allclose(np.asarray(logits), np.asarray(ref),
                               atol=2e-2, rtol=0.0)

    print("KERNEL_OK")
</pallas_src>

<mosaic_0001>
module attributes {stable_mosaic.version = 11 : i64} {
  func.func @_textcnn_kernel(%arg0: i32, %arg1: memref<192x32xbf16, #tpu.memory_space<vmem>>, %arg2: memref<32x512xbf16, #tpu.memory_space<vmem>>, %arg3: memref<1x128xf32, #tpu.memory_space<vmem>>, %arg4: memref<16x128xf32, #tpu.memory_space<vmem>>, %arg5: memref<128x128xbf16, #tpu.memory_space<vmem>>, %arg6: memref<1x128xf32, #tpu.memory_space<vmem>>, %arg7: memref<8x128xf32, #tpu.memory_space<vmem>>) attributes {dimension_semantics = [#tpu.dimension_semantics<parallel>], iteration_bounds = array<i64: 1>, scalar_prefetch = 0 : i64, scratch_operands = 0 : i64, tpu.core_type = #tpu.core_type<tc>, window_params = [{transform_indices = @transform_0, window_bounds = array<i64: 192, 32>}, {pipeline_mode = #tpu.pipeline_mode<synchronous>, transform_indices = @transform_1, window_bounds = array<i64: 32, 512>}, {pipeline_mode = #tpu.pipeline_mode<synchronous>, transform_indices = @transform_2, window_bounds = array<i64: 1, 128>}, {pipeline_mode = #tpu.pipeline_mode<synchronous>, transform_indices = @transform_3, window_bounds = array<i64: 16, 128>}, {pipeline_mode = #tpu.pipeline_mode<synchronous>, transform_indices = @transform_4, window_bounds = array<i64: 128, 128>}, {pipeline_mode = #tpu.pipeline_mode<synchronous>, transform_indices = @transform_5, window_bounds = array<i64: 1, 128>}, {transform_indices = @transform_6, window_bounds = array<i64: 8, 128>}]} {
    %c0 = arith.constant 0 : index
    %c0_0 = arith.constant 0 : index
    %0 = vector.load %arg1[%c0, %c0_0] : memref<192x32xbf16, #tpu.memory_space<vmem>>, vector<192x32xbf16>
    %c0_1 = arith.constant 0 : index
    %c0_2 = arith.constant 0 : index
    %1 = vector.load %arg2[%c0_1, %c0_2] : memref<32x512xbf16, #tpu.memory_space<vmem>>, vector<32x512xbf16>
    %2 = vector.extract_strided_slice %1 {offsets = [0, 0], sizes = [32, 128], strides = [1, 1]} : vector<32x512xbf16> to vector<32x128xbf16>
    %cst = arith.constant dense<0.000000e+00> : vector<192x128xf32>
    %3 = tpu.matmul %0, %2, %cst {dimension_numbers = #tpu.dot_dimension_numbers<[1], [0], [0], [1], [0, 0, 1, 1], [], []>} : vector<192x32xbf16>, vector<32x128xbf16>, vector<192x128xf32> -> vector<192x128xf32>
    %4 = vector.shape_cast %3 : vector<192x128xf32> to vector<8x24x128xf32>
    %5 = vector.extract_strided_slice %4 {offsets = [0, 0, 0], sizes = [8, 16, 128], strides = [1, 1, 1]} : vector<8x24x128xf32> to vector<8x16x128xf32>
    %6 = vector.extract_strided_slice %1 {offsets = [0, 128], sizes = [32, 128], strides = [1, 1]} : vector<32x512xbf16> to vector<32x128xbf16>
    %cst_3 = arith.constant dense<0.000000e+00> : vector<192x128xf32>
    %7 = tpu.matmul %0, %6, %cst_3 {dimension_numbers = #tpu.dot_dimension_numbers<[1], [0], [0], [1], [0, 0, 1, 1], [], []>} : vector<192x32xbf16>, vector<32x128xbf16>, vector<192x128xf32> -> vector<192x128xf32>
    %8 = vector.shape_cast %7 : vector<192x128xf32> to vector<8x24x128xf32>
    %9 = vector.extract_strided_slice %8 {offsets = [0, 1, 0], sizes = [8, 16, 128], strides = [1, 1, 1]} : vector<8x24x128xf32> to vector<8x16x128xf32>
    %10 = arith.addf %5, %9 : vector<8x16x128xf32>
    %11 = vector.extract_strided_slice %1 {offsets = [0, 256], sizes = [32, 128], strides = [1, 1]} : vector<32x512xbf16> to vector<32x128xbf16>
    %cst_4 = arith.constant dense<0.000000e+00> : vector<192x128xf32>
    %12 = tpu.matmul %0, %11, %cst_4 {dimension_numbers = #tpu.dot_dimension_numbers<[1], [0], [0], [1], [0, 0, 1, 1], [], []>} : vector<192x32xbf16>, vector<32x128xbf16>, vector<192x128xf32> -> vector<192x128xf32>
    %13 = vector.shape_cast %12 : vector<192x128xf32> to vector<8x24x128xf32>
    %14 = vector.extract_strided_slice %13 {offsets = [0, 2, 0], sizes = [8, 16, 128], strides = [1, 1, 1]} : vector<8x24x128xf32> to vector<8x16x128xf32>
    %15 = arith.addf %10, %14 : vector<8x16x128xf32>
    %16 = vector.extract_strided_slice %1 {offsets = [0, 384], sizes = [32, 128], strides = [1, 1]} : vector<32x512xbf16> to vector<32x128xbf16>
    %cst_5 = arith.constant dense<0.000000e+00> : vector<192x128xf32>
    %17 = tpu.matmul %0, %16, %cst_5 {dimension_numbers = #tpu.dot_dimension_numbers<[1], [0], [0], [1], [0, 0, 1, 1], [], []>} : vector<192x32xbf16>, vector<32x128xbf16>, vector<192x128xf32> -> vector<192x128xf32>
    %18 = vector.shape_cast %17 : vector<192x128xf32> to vector<8x24x128xf32>
    %19 = vector.extract_strided_slice %18 {offsets = [0, 3, 0], sizes = [8, 16, 128], strides = [1, 1, 1]} : vector<8x24x128xf32> to vector<8x16x128xf32>
    %20 = arith.addf %15, %19 : vector<8x16x128xf32>
    %c0_6 = arith.constant 0 : index
    %c0_7 = arith.constant 0 : index
    %21 = vector.load %arg3[%c0_6, %c0_7] : memref<1x128xf32, #tpu.memory_space<vmem>>, vector<1x128xf32>
    %22 = vector.shape_cast %21 : vector<1x128xf32> to vector<1x1x128xf32>
    %23 = vector.broadcast %22 : vector<1x1x128xf32> to vector<8x16x128xf32>
    %24 = arith.addf %20, %23 : vector<8x16x128xf32>
    %cst_8 = arith.constant 0.000000e+00 : f32
    %25 = vector.broadcast %cst_8 : f32 to vector<8x16x128xf32>
    %26 = arith.maximumf %24, %25 : vector<8x16x128xf32>
    %c0_9 = arith.constant 0 : index
    %c0_10 = arith.constant 0 : index
    %27 = vector.load %arg4[%c0_9, %c0_10] : memref<16x128xf32, #tpu.memory_space<vmem>>, vector<16x128xf32>
    %28 = vector.shape_cast %27 : vector<16x128xf32> to vector<1x16x128xf32>
    %29 = vector.broadcast %28 : vector<1x16x128xf32> to vector<8x16x128xf32>
    %30 = arith.mulf %26, %29 : vector<8x16x128xf32>
    %cst_11 = arith.constant dense<0xFF800000> : vector<8x128xf32>
    %31 = vector.multi_reduction <maximumf>, %30, %cst_11 [1] : vector<8x16x128xf32> to vector<8x128xf32>
    %32 = arith.truncf %31 : vector<8x128xf32> to vector<8x128xbf16>
    %c0_12 = arith.constant 0 : index
    %c0_13 = arith.constant 0 : index
    %33 = vector.load %arg5[%c0_12, %c0_13] : memref<128x128xbf16, #tpu.memory_space<vmem>>, vector<128x128xbf16>
    %cst_14 = arith.constant dense<0.000000e+00> : vector<8x128xf32>
    %34 = tpu.matmul %32, %33, %cst_14 {dimension_numbers = #tpu.dot_dimension_numbers<[1], [0], [0], [1], [0, 0, 1, 1], [], []>} : vector<8x128xbf16>, vector<128x128xbf16>, vector<8x128xf32> -> vector<8x128xf32>
    %c0_15 = arith.constant 0 : index
    %c0_16 = arith.constant 0 : index
    %35 = vector.load %arg6[%c0_15, %c0_16] : memref<1x128xf32, #tpu.memory_space<vmem>>, vector<1x128xf32>
    %36 = vector.broadcast %35 : vector<1x128xf32> to vector<8x128xf32>
    %37 = arith.addf %34, %36 : vector<8x128xf32>
    %c0_17 = arith.constant 0 : index
    %c0_18 = arith.constant 0 : index
    %38 = vector.load %arg7[%c0_17, %c0_18] : memref<8x128xf32, #tpu.memory_space<vmem>>, vector<8x128xf32>
    tpu.vector_store %arg7[%c0_17, %c0_18], %37 {strides = array<i32>} : memref<8x128xf32, #tpu.memory_space<vmem>>, vector<8x128xf32>,
    return
  }
  func.func @transform_0(%arg0: i32) -> (i32, i32) {
    %c0_i32 = arith.constant 0 : i32
    %c0_i32_0 = arith.constant 0 : i32
    return %arg0, %c0_i32 : i32, i32
  }
  func.func @transform_1(%arg0: i32) -> (i32, i32) {
    %c0_i32 = arith.constant 0 : i32
    %c0_i32_0 = arith.constant 0 : i32
    %c0_i32_1 = arith.constant 0 : i32
    return %c0_i32, %c0_i32_0 : i32, i32
  }
  func.func @transform_2(%arg0: i32) -> (i32, i32) {
    %c0_i32 = arith.constant 0 : i32
    %c0_i32_0 = arith.constant 0 : i32
    %c0_i32_1 = arith.constant 0 : i32
    return %c0_i32, %c0_i32_0 : i32, i32
  }
  func.func @transform_3(%arg0: i32) -> (i32, i32) {
    %c0_i32 = arith.constant 0 : i32
    %c0_i32_0 = arith.constant 0 : i32
    %c0_i32_1 = arith.constant 0 : i32
    return %c0_i32, %c0_i32_0 : i32, i32
  }
  func.func @transform_4(%arg0: i32) -> (i32, i32) {
    %c0_i32 = arith.constant 0 : i32
    %c0_i32_0 = arith.constant 0 : i32
    %c0_i32_1 = arith.constant 0 : i32
    return %c0_i32, %c0_i32_0 : i32, i32
  }
  func.func @transform_5(%arg0: i32) -> (i32, i32) {
    %c0_i32 = arith.constant 0 : i32
    %c0_i32_0 = arith.constant 0 : i32
    %c0_i32_1 = arith.constant 0 : i32
    return %c0_i32, %c0_i32_0 : i32, i32
  }
  func.func @transform_6(%arg0: i32) -> (i32, i32) {
    %c0_i32 = arith.constant 0 : i32
    %c0_i32_0 = arith.constant 0 : i32
    return %arg0, %c0_i32 : i32, i32
  }
}

</mosaic_0001>

<llo_original>
// kernel: textcnn_forward.1
$region0: #{textcnn_forward.1}
  #allocation0 [shape = 'u32[]', space=smem, size = 0x4, offset = 0x4, fixed_abs, tag = 'smem constant byte address 0x4 - core index']
  #allocation1 [shape = 'u32[144,128]{1,0:T(1,128)}', space=vmem, size = 0x12000, scoped, tag = 'internal scratch']
  %s0 = inlined_call_operand.vmem [shape: bf16[192,32], index: 0, kind: input, shape index: {}]
  %s1 = inlined_call_operand.vmem [shape: bf16[32,512], index: 1, kind: input, shape index: {}]
  %s2 = inlined_call_operand.vmem [shape: f32[1,128], index: 2, kind: input, shape index: {}]
  %s3 = inlined_call_operand.vmem [shape: f32[16,128], index: 3, kind: input, shape index: {}]
  %s4 = inlined_call_operand.vmem [shape: bf16[128,128], index: 4, kind: input, shape index: {}]
  %s5 = inlined_call_operand.vmem [shape: f32[1,128], index: 5, kind: input, shape index: {}]
  %s6 = inlined_call_operand.vmem [shape: f32[8,128], index: 6, kind: output, shape index: {}]
  %s7 = sld [smem:[#allocation0]]
  $region34: #{textcnn_forward.1} parent=0
    _
  %s9 = ssub.s32 1, %s7
  %s10 = scalar_select 0, %s9, %s7
  // Predicated region
  $region2: #{textcnn_forward.1} parent=0 // pred_check
    _
  $region3: #{textcnn_forward.1} parent=0 // pred_check_branch
    %12 = sbr.rel (0) target = $region5
  $region4: #{textcnn_forward.1} parent=0 // pred_region
    _
  $region5: #{textcnn_forward.1} parent=0 // pred_fallthru
    _
  // Predicated region
  $region6: #{textcnn_forward.1} parent=0 // pred_check
    _
  $region7: #{textcnn_forward.1} parent=0 // pred_check_branch
    %14 = sbr.rel (0) target = $region9
  $region8: #{textcnn_forward.1} parent=0 // pred_region
    _
  $region9: #{textcnn_forward.1} parent=0 // pred_fallthru
    _
  // Predicated region
  $region10: #{textcnn_forward.1} parent=0 // pred_check
    _
  $region11: #{textcnn_forward.1} parent=0 // pred_check_branch
    %16 = sbr.rel (0) target = $region13
  $region12: #{textcnn_forward.1} parent=0 // pred_region
    _
  $region13: #{textcnn_forward.1} parent=0 // pred_fallthru
    _
  // Predicated region
  $region14: #{textcnn_forward.1} parent=0 // pred_check
    _
  $region15: #{textcnn_forward.1} parent=0 // pred_check_branch
    %18 = sbr.rel (0) target = $region17
  $region16: #{textcnn_forward.1} parent=0 // pred_region
    _
  $region17: #{textcnn_forward.1} parent=0 // pred_fallthru
    _
  // Predicated region
  $region18: #{textcnn_forward.1} parent=0 // pred_check
    _
  $region19: #{textcnn_forward.1} parent=0 // pred_check_branch
    %20 = sbr.rel (0) target = $region21
  $region20: #{textcnn_forward.1} parent=0 // pred_region
    _
  $region21: #{textcnn_forward.1} parent=0 // pred_fallthru
    _
  // Predicated region
  $region22: #{textcnn_forward.1} parent=0 // pred_check
    _
  $region23: #{textcnn_forward.1} parent=0 // pred_check_branch
    %22 = sbr.rel (0) target = $region25
  $region24: #{textcnn_forward.1} parent=0 // pred_region
    _
  $region25: #{textcnn_forward.1} parent=0 // pred_fallthru
    _
  %v24 = vld [vmem:[%s0] sm:$0xf]
  %v25 = vld [vmem:[%s0 + $0x4] sm:$0xf]
  %v26 = vld [vmem:[%s0 + $0x8] sm:$0xf]
  %v27 = vld [vmem:[%s0 + $0xc] sm:$0xf]
  %v28 = vld [vmem:[%s0 + $0x10] sm:$0xf]
  %v29 = vld [vmem:[%s0 + $0x14] sm:$0xf]
  %v30 = vld [vmem:[%s0 + $0x18] sm:$0xf]
  %v31 = vld [vmem:[%s0 + $0x1c] sm:$0xf]
  %v32 = vld [vmem:[%s0 + $0x20] sm:$0xf]
  %v33 = vld [vmem:[%s0 + $0x24] sm:$0xf]
  %v34 = vld [vmem:[%s0 + $0x28] sm:$0xf]
  %v35 = vld [vmem:[%s0 + $0x2c] sm:$0xf]
  %v36 = vld [vmem:[%s0 + $0x30] sm:$0xf]
  %v37 = vld [vmem:[%s0 + $0x34] sm:$0xf]
  %v38 = vld [vmem:[%s0 + $0x38] sm:$0xf]
  %v39 = vld [vmem:[%s0 + $0x3c] sm:$0xf]
  %v40 = vld [vmem:[%s0 + $0x40] sm:$0xf]
  %v41 = vld [vmem:[%s0 + $0x44] sm:$0xf]
  %v42 = vld [vmem:[%s0 + $0x48] sm:$0xf]
  %v43 = vld [vmem:[%s0 + $0x4c] sm:$0xf]
  %v44 = vld [vmem:[%s0 + $0x50] sm:$0xf]
  %v45 = vld [vmem:[%s0 + $0x54] sm:$0xf]
  %v46 = vld [vmem:[%s0 + $0x58] sm:$0xf]
  %v47 = vld [vmem:[%s0 + $0x5c] sm:$0xf]
  %v48 = vld [vmem:[%s1] sm:$0xff]
  %v49 = vld [vmem:[%s1 + $0x8] sm:$0xff]
  %v50 = vld [vmem:[%s1 + $0x10] sm:$0xff]
  %v51 = vld [vmem:[%s1 + $0x18] sm:$0xff]
  %v52 = vld [vmem:[%s1 + $0x20] sm:$0xff]
  %v53 = vld [vmem:[%s1 + $0x28] sm:$0xff]
  %v54 = vld [vmem:[%s1 + $0x30] sm:$0xff]
  %v55 = vld [vmem:[%s1 + $0x38] sm:$0xff]
  %v80 = vunpack.c.l.b16 %v24
  %v81 = vunpack.c.l.b16 %v25
  %v82 = vunpack.c.l.b16 %v26
  %v83 = vunpack.c.l.b16 %v27
  %v84 = vunpack.c.l.b16 %v28
  %v85 = vunpack.c.l.b16 %v29
  %v86 = vunpack.c.l.b16 %v30
  %v87 = vunpack.c.l.b16 %v31
  %v88 = vunpack.c.l.b16 %v32
  %v89 = vunpack.c.l.b16 %v33
  %v90 = vunpack.c.l.b16 %v34
  %v91 = vunpack.c.l.b16 %v35
  %v92 = vunpack.c.l.b16 %v36
  %v93 = vunpack.c.l.b16 %v37
  %v94 = vunpack.c.l.b16 %v38
  %v95 = vunpack.c.l.b16 %v39
  %v96 = vunpack.c.l.b16 %v40
  %v97 = vunpack.c.l.b16 %v41
  %v98 = vunpack.c.l.b16 %v42
  %v99 = vunpack.c.l.b16 %v43
  %v100 = vunpack.c.l.b16 %v44
  %v101 = vunpack.c.l.b16 %v45
  %v102 = vunpack.c.l.b16 %v46
  %v103 = vunpack.c.l.b16 %v47
  %v104 = vpack.c.b16 %v81, %v80
  %v105 = vpack.c.b16 %v83, %v82
  %v106 = vpack.c.b16 %v85, %v84
  %v107 = vpack.c.b16 %v87, %v86
  %v108 = vpack.c.b16 %v89, %v88
  %v109 = vpack.c.b16 %v91, %v90
  %v110 = vpack.c.b16 %v93, %v92
  %v111 = vpack.c.b16 %v95, %v94
  %v112 = vpack.c.b16 %v97, %v96
  %v113 = vpack.c.b16 %v99, %v98
  %v114 = vpack.c.b16 %v101, %v100
  %v115 = vpack.c.b16 %v103, %v102
  %v120 = vunpack.c.l.b16 %v48
  %v121 = vunpack.c.l.b16 %v50
  %v122 = vunpack.c.l.b16 %v52
  %v123 = vunpack.c.l.b16 %v54
  %v124 = vpack.c.b16 %v121, %v120
  %v125 = vpack.c.b16 %v123, %v122
  %vm128 = vcmask 261120
  %v130 = vsel %vm128, %v104, 0
  %v133 = vsel %vm128, %v105, 0
  %v136 = vsel %vm128, %v106, 0
  %v139 = vsel %vm128, %v107, 0
  %v142 = vsel %vm128, %v108, 0
  %v145 = vsel %vm128, %v109, 0
  %v148 = vsel %vm128, %v110, 0
  %v151 = vsel %vm128, %v111, 0
  %v154 = vsel %vm128, %v112, 0
  %v157 = vsel %vm128, %v113, 0
  %v160 = vsel %vm128, %v114, 0
  %v163 = vsel %vm128, %v115, 0
  %165 = vmatprep.subr.bf16.mxu0 0
  %166 = vmatpush1.bf16.msra.mxu0 %v124
  %167 = vmatprep.subr.bf16.mxu0 0
  %168 = vmatpush1.bf16.msra.mxu0 %v125
  %169 = vmatprep.subr.bf16.mxu0 0
  %170 = vmatpush1.bf16.msra.mxu0 0
  %171 = vmatprep.subr.bf16.mxu0 0
  %172 = vmatpush1.bf16.msra.mxu0 0
  %173 = vmatprep.subr.bf16.mxu0 0
  %174 = vmatpush1.bf16.msra.mxu0 0
  %175 = vmatprep.subr.bf16.mxu0 0
  %176 = vmatpush1.bf16.msra.mxu0 0
  %177 = vmatprep.subr.bf16.mxu0 0
  %178 = vmatpush1.bf16.msra.mxu0 0
  %179 = vmatprep.subr.bf16.mxu0 0
  %180 = vmatpush1.bf16.msra.mxu0 0
  %181 = vmatprep.subr.bf16.mxu0 0
  %182 = vmatpush1.bf16.msra.mxu0 0
  %183 = vmatprep.subr.bf16.mxu0 0
  %184 = vmatpush1.bf16.msra.mxu0 0
  %185 = vmatprep.subr.bf16.mxu0 0
  %186 = vmatpush1.bf16.msra.mxu0 0
  %187 = vmatprep.subr.bf16.mxu0 0
  %188 = vmatpush1.bf16.msra.mxu0 0
  %189 = vmatprep.subr.bf16.mxu0 0
  %190 = vmatpush1.bf16.msra.mxu0 0
  %191 = vmatprep.subr.bf16.mxu0 0
  %192 = vmatpush1.bf16.msra.mxu0 0
  %193 = vmatprep.subr.bf16.mxu0 0
  %194 = vmatpush1.bf16.msra.mxu0 0
  %195 = vmatprep.subr.bf16.mxu0 0
  %196 = vmatpush1.bf16.msra.mxu0 0
  %197 = vmatprep.mubr.bf16.mxu0 0
  %198 = vmatmul.mubr.bf16.gmra.mrb[0].mxu0 %v130
  %v199 = vpop.f32.mrb[0].mxu0
  %v200 = vadd.f32 0.0, %v199
  %v201 = vpop.f32.mrb[0].mxu0
  %v202 = vpop.f32.mrb[0].mxu0
  %v203 = vadd.f32 0.0, %v202
  %v204 = vpop.f32.mrb[0].mxu0
  %205 = vmatprep.mubr.bf16.mxu0 0
  %206 = vmatmul.mubr.bf16.gmra.mrb[0].mxu0 %v133
  %v207 = vpop.f32.mrb[0].mxu0
  %v208 = vpop.f32.mrb[0].mxu0
  %v209 = vpop.f32.mrb[0].mxu0
  %v210 = vadd.f32 0.0, %v209
  %v211 = vpop.f32.mrb[0].mxu0
  %212 = vmatprep.mubr.bf16.mxu0 0
  %213 = vmatmul.mubr.bf16.gmra.mrb[0].mxu0 %v136
  %v214 = vpop.f32.mrb[0].mxu0
  %v215 = vadd.f32 0.0, %v214
  %v216 = vpop.f32.mrb[0].mxu0
  %v217 = vpop.f32.mrb[0].mxu0
  %v218 = vpop.f32.mrb[0].mxu0
  %219 = vmatprep.mubr.bf16.mxu0 0
  %220 = vmatmul.mubr.bf16.gmra.mrb[0].mxu0 %v139
  %v221 = vpop.f32.mrb[0].mxu0
  %v222 = vadd.f32 0.0, %v221
  %v223 = vpop.f32.mrb[0].mxu0
  %v224 = vpop.f32.mrb[0].mxu0
  %v225 = vadd.f32 0.0, %v224
  %v226 = vpop.f32.mrb[0].mxu0
  %227 = vmatprep.mubr.bf16.mxu0 0
  %228 = vmatmul.mubr.bf16.gmra.mrb[0].mxu0 %v142
  %v229 = vpop.f32.mrb[0].mxu0
  %v230 = vpop.f32.mrb[0].mxu0
  %v231 = vpop.f32.mrb[0].mxu0
  %v232 = vadd.f32 0.0, %v231
  %v233 = vpop.f32.mrb[0].mxu0
  %234 = vmatprep.mubr.bf16.mxu0 0
  %235 = vmatmul.mubr.bf16.gmra.mrb[0].mxu0 %v145
  %v236 = vpop.f32.mrb[0].mxu0
  %v237 = vadd.f32 0.0, %v236
  %v238 = vpop.f32.mrb[0].mxu0
  %v239 = vpop.f32.mrb[0].mxu0
  %v240 = vpop.f32.mrb[0].mxu0
  %241 = vmatprep.mubr.bf16.mxu0 0
  %242 = vmatmul.mubr.bf16.gmra.mrb[0].mxu0 %v148
  %v243 = vpop.f32.mrb[0].mxu0
  %v244 = vadd.f32 0.0, %v243
  %v245 = vpop.f32.mrb[0].mxu0
  %v246 = vpop.f32.mrb[0].mxu0
  %v247 = vadd.f32 0.0, %v246
  %v248 = vpop.f32.mrb[0].mxu0
  %249 = vmatprep.mubr.bf16.mxu0 0
  %250 = vmatmul.mubr.bf16.gmra.mrb[0].mxu0 %v151
  %v251 = vpop.f32.mrb[0].mxu0
  %v252 = vpop.f32.mrb[0].mxu0
  %v253 = vpop.f32.mrb[0].mxu0
  %v254 = vadd.f32 0.0, %v253
  %v255 = vpop.f32.mrb[0].mxu0
  %256 = vmatprep.mubr.bf16.mxu0 0
  %257 = vmatmul.mubr.bf16.gmra.mrb[0].mxu0 %v154
  %v258 = vpop.f32.mrb[0].mxu0
  %v259 = vadd.f32 0.0, %v258
  %v260 = vpop.f32.mrb[0].mxu0
  %v261 = vpop.f32.mrb[0].mxu0
  %v262 = vpop.f32.mrb[0].mxu0
  %263 = vmatprep.mubr.bf16.mxu0 0
  %264 = vmatmul.mubr.bf16.gmra.mrb[0].mxu0 %v157
  %v265 = vpop.f32.mrb[0].mxu0
  %v266 = vadd.f32 0.0, %v265
  %v267 = vpop.f32.mrb[0].mxu0
  %v268 = vpop.f32.mrb[0].mxu0
  %v269 = vadd.f32 0.0, %v268
  %v270 = vpop.f32.mrb[0].mxu0
  %271 = vmatprep.mubr.bf16.mxu0 0
  %272 = vmatmul.mubr.bf16.gmra.mrb[0].mxu0 %v160
  %v273 = vpop.f32.mrb[0].mxu0
  %v274 = vpop.f32.mrb[0].mxu0
  %v275 = vpop.f32.mrb[0].mxu0
  %v276 = vadd.f32 0.0, %v275
  %v277 = vpop.f32.mrb[0].mxu0
  %278 = vmatprep.mubr.bf16.mxu0 0
  %279 = vmatmul.mubr.bf16.gmra.mrb[0].mxu0 %v163
  %v280 = vpop.f32.mrb[0].mxu0
  %v281 = vadd.f32 0.0, %v280
  %v282 = vpop.f32.mrb[0].mxu0
  %v283 = vpop.f32.mrb[0].mxu0
  %v284 = vpop.f32.mrb[0].mxu0
  %285 = vdwg.mxu0
  %v286 = vunpack.c.h.b16 %v48
  %v287 = vunpack.c.h.b16 %v50
  %v288 = vunpack.c.h.b16 %v52
  %v289 = vunpack.c.h.b16 %v54
  %v290 = vpack.c.b16 %v287, %v286
  %v291 = vpack.c.b16 %v289, %v288
  %294 = vmatprep.subr.bf16.mxu0 0
  %295 = vmatpush1.bf16.msra.mxu0 %v290
  %296 = vmatprep.subr.bf16.mxu0 0
  %297 = vmatpush1.bf16.msra.mxu0 %v291
  %298 = vmatprep.subr.bf16.mxu0 0
  %299 = vmatpush1.bf16.msra.mxu0 0
  %300 = vmatprep.subr.bf16.mxu0 0
  %301 = vmatpush1.bf16.msra.mxu0 0
  %302 = vmatprep.subr.bf16.mxu0 0
  %303 = vmatpush1.bf16.msra.mxu0 0
  %304 = vmatprep.subr.bf16.mxu0 0
  %305 = vmatpush1.bf16.msra.mxu0 0
  %306 = vmatprep.subr.bf16.mxu0 0
  %307 = vmatpush1.bf16.msra.mxu0 0
  %308 = vmatprep.subr.bf16.mxu0 0
  %309 = vmatpush1.bf16.msra.mxu0 0
  %310 = vmatprep.subr.bf16.mxu0 0
  %311 = vmatpush1.bf16.msra.mxu0 0
  %312 = vmatprep.subr.bf16.mxu0 0
  %313 = vmatpush1.bf16.msra.mxu0 0
  %314 = vmatprep.subr.bf16.mxu0 0
  %315 = vmatpush1.bf16.msra.mxu0 0
  %316 = vmatprep.subr.bf16.mxu0 0
  %317 = vmatpush1.bf16.msra.mxu0 0
  %318 = vmatprep.subr.bf16.mxu0 0
  %319 = vmatpush1.bf16.msra.mxu0 0
  %320 = vmatprep.subr.bf16.mxu0 0
  %321 = vmatpush1.bf16.msra.mxu0 0
  %322 = vmatprep.subr.bf16.mxu0 0
  %323 = vmatpush1.bf16.msra.mxu0 0
  %324 = vmatprep.subr.bf16.mxu0 0
  %325 = vmatpush1.bf16.msra.mxu0 0
  %326 = vmatprep.mubr.bf16.mxu0 0
  %327 = vmatmul.mubr.bf16.gmra.mrb[0].mxu0 %v130
  %v328 = vpop.f32.mrb[0].mxu0
  %v329 = vadd.f32 0.0, %v328
  %v330 = vpop.f32.mrb[0].mxu0
  %v331 = vpop.f32.mrb[0].mxu0
  %v332 = vadd.f32 0.0, %v331
  %v333 = vpop.f32.mrb[0].mxu0
  %334 = vmatprep.mubr.bf16.mxu0 0
  %335 = vmatmul.mubr.bf16.gmra.mrb[0].mxu0 %v133
  %v336 = vpop.f32.mrb[0].mxu0
  %v337 = vadd.f32 0.0, %v336
  %v338 = vpop.f32.mrb[0].mxu0
  %v339 = vpop.f32.mrb[0].mxu0
  %v340 = vadd.f32 0.0, %v339
  %v341 = vpop.f32.mrb[0].mxu0
  %342 = vmatprep.mubr.bf16.mxu0 0
  %343 = vmatmul.mubr.bf16.gmra.mrb[0].mxu0 %v136
  %v344 = vpop.f32.mrb[0].mxu0
  %v345 = vadd.f32 0.0, %v344
  %v346 = vpop.f32.mrb[0].mxu0
  %v347 = vpop.f32.mrb[0].mxu0
  %v348 = vadd.f32 0.0, %v347
  %v349 = vpop.f32.mrb[0].mxu0
  %350 = vmatprep.mubr.bf16.mxu0 0
  %351 = vmatmul.mubr.bf16.gmra.mrb[0].mxu0 %v139
  %v352 = vpop.f32.mrb[0].mxu0
  %v353 = vadd.f32 0.0, %v352
  %v354 = vpop.f32.mrb[0].mxu0
  %v355 = vpop.f32.mrb[0].mxu0
  %v356 = vadd.f32 0.0, %v355
  %v357 = vpop.f32.mrb[0].mxu0
  %358 = vmatprep.mubr.bf16.mxu0 0
  %359 = vmatmul.mubr.bf16.gmra.mrb[0].mxu0 %v142
  %v360 = vpop.f32.mrb[0].mxu0
  %v361 = vadd.f32 0.0, %v360
  %v362 = vpop.f32.mrb[0].mxu0
  %v363 = vpop.f32.mrb[0].mxu0
  %v364 = vadd.f32 0.0, %v363
  %v365 = vpop.f32.mrb[0].mxu0
  %366 = vmatprep.mubr.bf16.mxu0 0
  %367 = vmatmul.mubr.bf16.gmra.mrb[0].mxu0 %v145
  %v368 = vpop.f32.mrb[0].mxu0
  %v369 = vadd.f32 0.0, %v368
  %v370 = vpop.f32.mrb[0].mxu0
  %v371 = vpop.f32.mrb[0].mxu0
  %v372 = vadd.f32 0.0, %v371
  %v373 = vpop.f32.mrb[0].mxu0
  %374 = vmatprep.mubr.bf16.mxu0 0
  %375 = vmatmul.mubr.bf16.gmra.mrb[0].mxu0 %v148
  %v376 = vpop.f32.mrb[0].mxu0
  %v377 = vadd.f32 0.0, %v376
  %v378 = vpop.f32.mrb[0].mxu0
  %v379 = vpop.f32.mrb[0].mxu0
  %v380 = vadd.f32 0.0, %v379
  %v381 = vpop.f32.mrb[0].mxu0
  %382 = vmatprep.mubr.bf16.mxu0 0
  %383 = vmatmul.mubr.bf16.gmra.mrb[0].mxu0 %v151
  %v384 = vpop.f32.mrb[0].mxu0
  %v385 = vadd.f32 0.0, %v384
  %v386 = vpop.f32.mrb[0].mxu0
  %v387 = vpop.f32.mrb[0].mxu0
  %v388 = vadd.f32 0.0, %v387
  %v389 = vpop.f32.mrb[0].mxu0
  %390 = vmatprep.mubr.bf16.mxu0 0
  %391 = vmatmul.mubr.bf16.gmra.mrb[0].mxu0 %v154
  %v392 = vpop.f32.mrb[0].mxu0
  %v393 = vadd.f32 0.0, %v392
  %v394 = vpop.f32.mrb[0].mxu0
  %v395 = vpop.f32.mrb[0].mxu0
  %v396 = vadd.f32 0.0, %v395
  %v397 = vpop.f32.mrb[0].mxu0
  %398 = vmatprep.mubr.bf16.mxu0 0
  %399 = vmatmul.mubr.bf16.gmra.mrb[0].mxu0 %v157
  %v400 = vpop.f32.mrb[0].mxu0
  %v401 = vadd.f32 0.0, %v400
  %v402 = vpop.f32.mrb[0].mxu0
  %v403 = vpop.f32.mrb[0].mxu0
  %v404 = vadd.f32 0.0, %v403
  %v405 = vpop.f32.mrb[0].mxu0
  %406 = vmatprep.mubr.bf16.mxu0 0
  %407 = vmatmul.mubr.bf16.gmra.mrb[0].mxu0 %v160
  %v408 = vpop.f32.mrb[0].mxu0
  %v409 = vadd.f32 0.0, %v408
  %v410 = vpop.f32.mrb[0].mxu0
  %v411 = vpop.f32.mrb[0].mxu0
  %v412 = vadd.f32 0.0, %v411
  %v413 = vpop.f32.mrb[0].mxu0
  %414 = vmatprep.mubr.bf16.mxu0 0
  %415 = vmatmul.mubr.bf16.gmra.mrb[0].mxu0 %v163
  %v416 = vpop.f32.mrb[0].mxu0
  %v417 = vadd.f32 0.0, %v416
  %v418 = vpop.f32.mrb[0].mxu0
  %v419 = vpop.f32.mrb[0].mxu0
  %v420 = vadd.f32 0.0, %v419
  %v421 = vpop.f32.mrb[0].mxu0
  %422 = vdwg.mxu0
  %vm447 = vcmask 1046528
  %v448 = vrot.slane %v329, 1
  %v449 = vrot.slane %v332, 1
  %v450 = vsel %vm447, %v448, %v449
  %v451 = vrot.slane %v337, 1
  %v452 = vsel %vm447, %v449, %v451
  %v453 = vrot.slane %v340, 1
  %v454 = vrot.slane %v345, 1
  %v455 = vsel %vm447, %v453, %v454
  %v456 = vrot.slane %v348, 1
  %v457 = vsel %vm447, %v454, %v456
  %v458 = vrot.slane %v353, 1
  %v459 = vrot.slane %v356, 1
  %v460 = vsel %vm447, %v458, %v459
  %v461 = vrot.slane %v361, 1
  %v462 = vsel %vm447, %v459, %v461
  %v463 = vrot.slane %v364, 1
  %v464 = vrot.slane %v369, 1
  %v465 = vsel %vm447, %v463, %v464
  %v466 = vrot.slane %v372, 1
  %v467 = vsel %vm447, %v464, %v466
  %v468 = vrot.slane %v377, 1
  %v469 = vrot.slane %v380, 1
  %v470 = vsel %vm447, %v468, %v469
  %v471 = vrot.slane %v385, 1
  %v472 = vsel %vm447, %v469, %v471
  %v473 = vrot.slane %v388, 1
  %v474 = vrot.slane %v393, 1
  %v475 = vsel %vm447, %v473, %v474
  %v476 = vrot.slane %v396, 1
  %v477 = vsel %vm447, %v474, %v476
  %v478 = vrot.slane %v401, 1
  %v479 = vrot.slane %v404, 1
  %v480 = vsel %vm447, %v478, %v479
  %v481 = vrot.slane %v409, 1
  %v482 = vsel %vm447, %v479, %v481
  %v483 = vrot.slane %v412, 1
  %v484 = vrot.slane %v417, 1
  %v485 = vsel %vm447, %v483, %v484
  %v486 = vrot.slane %v420, 1
  %v487 = vsel %vm447, %v484, %v486
  %v504 = vadd.f32 %v200, %v450
  %v505 = vadd.f32 %v203, %v452
  %v506 = vadd.f32 %v210, %v455
  %v507 = vadd.f32 %v215, %v457
  %v508 = vadd.f32 %v222, %v460
  %v509 = vadd.f32 %v225, %v462
  %v510 = vadd.f32 %v232, %v465
  %v511 = vadd.f32 %v237, %v467
  %v512 = vadd.f32 %v244, %v470
  %v513 = vadd.f32 %v247, %v472
  %v514 = vadd.f32 %v254, %v475
  %v515 = vadd.f32 %v259, %v477
  %v516 = vadd.f32 %v266, %v480
  %v517 = vadd.f32 %v269, %v482
  %v518 = vadd.f32 %v276, %v485
  %v519 = vadd.f32 %v281, %v487
  %v524 = vunpack.c.l.b16 %v49
  %v525 = vunpack.c.l.b16 %v51
  %v526 = vunpack.c.l.b16 %v53
  %v527 = vunpack.c.l.b16 %v55
  %v528 = vpack.c.b16 %v525, %v524
  %v529 = vpack.c.b16 %v527, %v526
  %532 = vmatprep.subr.bf16.mxu0 0
  %533 = vmatpush1.bf16.msra.mxu0 %v528
  %534 = vmatprep.subr.bf16.mxu0 0
  %535 = vmatpush1.bf16.msra.mxu0 %v529
  %536 = vmatprep.subr.bf16.mxu0 0
  %537 = vmatpush1.bf16.msra.mxu0 0
  %538 = vmatprep.subr.bf16.mxu0 0
  %539 = vmatpush1.bf16.msra.mxu0 0
  %540 = vmatprep.subr.bf16.mxu0 0
  %541 = vmatpush1.bf16.msra.mxu0 0
  %542 = vmatprep.subr.bf16.mxu0 0
  %543 = vmatpush1.bf16.msra.mxu0 0
  %544 = vmatprep.subr.bf16.mxu0 0
  %545 = vmatpush1.bf16.msra.mxu0 0
  %546 = vmatprep.subr.bf16.mxu0 0
  %547 = vmatpush1.bf16.msra.mxu0 0
  %548 = vmatprep.subr.bf16.mxu0 0
  %549 = vmatpush1.bf16.msra.mxu0 0
  %550 = vmatprep.subr.bf16.mxu0 0
  %551 = vmatpush1.bf16.msra.mxu0 0
  %552 = vmatprep.subr.bf16.mxu0 0
  %553 = vmatpush1.bf16.msra.mxu0 0
  %554 = vmatprep.subr.bf16.mxu0 0
  %555 = vmatpush1.bf16.msra.mxu0 0
  %556 = vmatprep.subr.bf16.mxu0 0
  %557 = vmatpush1.bf16.msra.mxu0 0
  %558 = vmatprep.subr.bf16.mxu0 0
  %559 = vmatpush1.bf16.msra.mxu0 0
  %560 = vmatprep.subr.bf16.mxu0 0
  %561 = vmatpush1.bf16.msra.mxu0 0
  %562 = vmatprep.subr.bf16.mxu0 0
  %563 = vmatpush1.bf16.msra.mxu0 0
  %564 = vmatprep.mubr.bf16.mxu0 0
  %565 = vmatmul.mubr.bf16.gmra.mrb[0].mxu0 %v130
  %v566 = vpop.f32.mrb[0].mxu0
  %v567 = vadd.f32 0.0, %v566
  %v568 = vpop.f32.mrb[0].mxu0
  %v569 = vpop.f32.mrb[0].mxu0
  %v570 = vadd.f32 0.0, %v569
  %v571 = vpop.f32.mrb[0].mxu0
  %572 = vmatprep.mubr.bf16.mxu0 0
  %573 = vmatmul.mubr.bf16.gmra.mrb[0].mxu0 %v133
  %v574 = vpop.f32.mrb[0].mxu0
  %v575 = vadd.f32 0.0, %v574
  %v576 = vpop.f32.mrb[0].mxu0
  %v577 = vpop.f32.mrb[0].mxu0
  %v578 = vadd.f32 0.0, %v577
  %v579 = vpop.f32.mrb[0].mxu0
  %580 = vmatprep.mubr.bf16.mxu0 0
  %581 = vmatmul.mubr.bf16.gmra.mrb[0].mxu0 %v136
  %v582 = vpop.f32.mrb[0].mxu0
  %v583 = vadd.f32 0.0, %v582
  %v584 = vpop.f32.mrb[0].mxu0
  %v585 = vpop.f32.mrb[0].mxu0
  %v586 = vadd.f32 0.0, %v585
  %v587 = vpop.f32.mrb[0].mxu0
  %588 = vmatprep.mubr.bf16.mxu0 0
  %589 = vmatmul.mubr.bf16.gmra.mrb[0].mxu0 %v139
  %v590 = vpop.f32.mrb[0].mxu0
  %v591 = vadd.f32 0.0, %v590
  %v592 = vpop.f32.mrb[0].mxu0
  %v593 = vpop.f32.mrb[0].mxu0
  %v594 = vadd.f32 0.0, %v593
  %v595 = vpop.f32.mrb[0].mxu0
  %596 = vmatprep.mubr.bf16.mxu0 0
  %597 = vmatmul.mubr.bf16.gmra.mrb[0].mxu0 %v142
  %v598 = vpop.f32.mrb[0].mxu0
  %v599 = vadd.f32 0.0, %v598
  %v600 = vpop.f32.mrb[0].mxu0
  %v601 = vpop.f32.mrb[0].mxu0
  %v602 = vadd.f32 0.0, %v601
  %v603 = vpop.f32.mrb[0].mxu0
  %604 = vmatprep.mubr.bf16.mxu0 0
  %605 = vmatmul.mubr.bf16.gmra.mrb[0].mxu0 %v145
  %v606 = vpop.f32.mrb[0].mxu0
  %v607 = vadd.f32 0.0, %v606
  %v608 = vpop.f32.mrb[0].mxu0
  %v609 = vpop.f32.mrb[0].mxu0
  %v610 = vadd.f32 0.0, %v609
  %v611 = vpop.f32.mrb[0].mxu0
  %612 = vmatprep.mubr.bf16.mxu0 0
  %613 = vmatmul.mubr.bf16.gmra.mrb[0].mxu0 %v148
  %v614 = vpop.f32.mrb[0].mxu0
  %v615 = vadd.f32 0.0, %v614
  %v616 = vpop.f32.mrb[0].mxu0
  %v617 = vpop.f32.mrb[0].mxu0
  %v618 = vadd.f32 0.0, %v617
  %v619 = vpop.f32.mrb[0].mxu0
  %620 = vmatprep.mubr.bf16.mxu0 0
  %621 = vmatmul.mubr.bf16.gmra.mrb[0].mxu0 %v151
  %v622 = vpop.f32.mrb[0].mxu0
  %v623 = vadd.f32 0.0, %v622
  %v624 = vpop.f32.mrb[0].mxu0
  %v625 = vpop.f32.mrb[0].mxu0
  %v626 = vadd.f32 0.0, %v625
  %v627 = vpop.f32.mrb[0].mxu0
  %628 = vmatprep.mubr.bf16.mxu0 0
  %629 = vmatmul.mubr.bf16.gmra.mrb[0].mxu0 %v154
  %v630 = vpop.f32.mrb[0].mxu0
  %v631 = vadd.f32 0.0, %v630
  %v632 = vpop.f32.mrb[0].mxu0
  %v633 = vpop.f32.mrb[0].mxu0
  %v634 = vadd.f32 0.0, %v633
  %v635 = vpop.f32.mrb[0].mxu0
  %636 = vmatprep.mubr.bf16.mxu0 0
  %637 = vmatmul.mubr.bf16.gmra.mrb[0].mxu0 %v157
  %v638 = vpop.f32.mrb[0].mxu0
  %v639 = vadd.f32 0.0, %v638
  %v640 = vpop.f32.mrb[0].mxu0
  %v641 = vpop.f32.mrb[0].mxu0
  %v642 = vadd.f32 0.0, %v641
  %v643 = vpop.f32.mrb[0].mxu0
  %644 = vmatprep.mubr.bf16.mxu0 0
  %645 = vmatmul.mubr.bf16.gmra.mrb[0].mxu0 %v160
  %v646 = vpop.f32.mrb[0].mxu0
  %v647 = vadd.f32 0.0, %v646
  %v648 = vpop.f32.mrb[0].mxu0
  %v649 = vpop.f32.mrb[0].mxu0
  %v650 = vadd.f32 0.0, %v649
  %v651 = vpop.f32.mrb[0].mxu0
  %652 = vmatprep.mubr.bf16.mxu0 0
  %653 = vmatmul.mubr.bf16.gmra.mrb[0].mxu0 %v163
  %v654 = vpop.f32.mrb[0].mxu0
  %v655 = vadd.f32 0.0, %v654
  %v656 = vpop.f32.mrb[0].mxu0
  %v657 = vpop.f32.mrb[0].mxu0
  %v658 = vadd.f32 0.0, %v657
  %v659 = vpop.f32.mrb[0].mxu0
  %660 = vdwg.mxu0
  %vm685 = vcmask 1045504
  %v686 = vrot.slane %v567, 2
  %v687 = vrot.slane %v570, 2
  %v688 = vsel %vm685, %v686, %v687
  %v689 = vrot.slane %v575, 2
  %v690 = vsel %vm685, %v687, %v689
  %v691 = vrot.slane %v578, 2
  %v692 = vrot.slane %v583, 2
  %v693 = vsel %vm685, %v691, %v692
  %v694 = vrot.slane %v586, 2
  %v695 = vsel %vm685, %v692, %v694
  %v696 = vrot.slane %v591, 2
  %v697 = vrot.slane %v594, 2
  %v698 = vsel %vm685, %v696, %v697
  %v699 = vrot.slane %v599, 2
  %v700 = vsel %vm685, %v697, %v699
  %v701 = vrot.slane %v602, 2
  %v702 = vrot.slane %v607, 2
  %v703 = vsel %vm685, %v701, %v702
  %v704 = vrot.slane %v610, 2
  %v705 = vsel %vm685, %v702, %v704
  %v706 = vrot.slane %v615, 2
  %v707 = vrot.slane %v618, 2
  %v708 = vsel %vm685, %v706, %v707
  %v709 = vrot.slane %v623, 2
  %v710 = vsel %vm685, %v707, %v709
  %v711 = vrot.slane %v626, 2
  %v712 = vrot.slane %v631, 2
  %v713 = vsel %vm685, %v711, %v712
  %v714 = vrot.slane %v634, 2
  %v715 = vsel %vm685, %v712, %v714
  %v716 = vrot.slane %v639, 2
  %v717 = vrot.slane %v642, 2
  %v718 = vsel %vm685, %v716, %v717
  %v719 = vrot.slane %v647, 2
  %v720 = vsel %vm685, %v717, %v719
  %v721 = vrot.slane %v650, 2
  %v722 = vrot.slane %v655, 2
  %v723 = vsel %vm685, %v721, %v722
  %v724 = vrot.slane %v658, 2
  %v725 = vsel %vm685, %v722, %v724
  %v742 = vadd.f32 %v504, %v688
  %v743 = vadd.f32 %v505, %v690
  %v744 = vadd.f32 %v506, %v693
  %v745 = vadd.f32 %v507, %v695
  %v746 = vadd.f32 %v508, %v698
  %v747 = vadd.f32 %v509, %v700
  %v748 = vadd.f32 %v510, %v703
  %v749 = vadd.f32 %v511, %v705
  %v750 = vadd.f32 %v512, %v708
  %v751 = vadd.f32 %v513, %v710
  %v752 = vadd.f32 %v514, %v713
  %v753 = vadd.f32 %v515, %v715
  %v754 = vadd.f32 %v516, %v718
  %v755 = vadd.f32 %v517, %v720
  %v756 = vadd.f32 %v518, %v723
  %v757 = vadd.f32 %v519, %v725
  %v758 = vunpack.c.h.b16 %v49
  %v759 = vunpack.c.h.b16 %v51
  %v760 = vunpack.c.h.b16 %v53
  %v761 = vunpack.c.h.b16 %v55
  %v762 = vpack.c.b16 %v759, %v758
  %v763 = vpack.c.b16 %v761, %v760
  %766 = vmatprep.subr.bf16.mxu0 0
  %767 = vmatpush1.bf16.msra.mxu0 %v762
  %768 = vmatprep.subr.bf16.mxu0 0
  %769 = vmatpush1.bf16.msra.mxu0 %v763
  %770 = vmatprep.subr.bf16.mxu0 0
  %771 = vmatpush1.bf16.msra.mxu0 0
  %772 = vmatprep.subr.bf16.mxu0 0
  %773 = vmatpush1.bf16.msra.mxu0 0
  %774 = vmatprep.subr.bf16.mxu0 0
  %775 = vmatpush1.bf16.msra.mxu0 0
  %776 = vmatprep.subr.bf16.mxu0 0
  %777 = vmatpush1.bf16.msra.mxu0 0
  %778 = vmatprep.subr.bf16.mxu0 0
  %779 = vmatpush1.bf16.msra.mxu0 0
  %780 = vmatprep.subr.bf16.mxu0 0
  %781 = vmatpush1.bf16.msra.mxu0 0
  %782 = vmatprep.subr.bf16.mxu0 0
  %783 = vmatpush1.bf16.msra.mxu0 0
  %784 = vmatprep.subr.bf16.mxu0 0
  %785 = vmatpush1.bf16.msra.mxu0 0
  %786 = vmatprep.subr.bf16.mxu0 0
  %787 = vmatpush1.bf16.msra.mxu0 0
  %788 = vmatprep.subr.bf16.mxu0 0
  %789 = vmatpush1.bf16.msra.mxu0 0
  %790 = vmatprep.subr.bf16.mxu0 0
  %791 = vmatpush1.bf16.msra.mxu0 0
  %792 = vmatprep.subr.bf16.mxu0 0
  %793 = vmatpush1.bf16.msra.mxu0 0
  %794 = vmatprep.subr.bf16.mxu0 0
  %795 = vmatpush1.bf16.msra.mxu0 0
  %796 = vmatprep.subr.bf16.mxu0 0
  %797 = vmatpush1.bf16.msra.mxu0 0
  %798 = vmatprep.mubr.bf16.mxu0 0
  %799 = vmatmul.mubr.bf16.gmra.mrb[0].mxu0 %v130
  %v800 = vpop.f32.mrb[0].mxu0
  %v801 = vadd.f32 0.0, %v800
  %v802 = vpop.f32.mrb[0].mxu0
  %v803 = vpop.f32.mrb[0].mxu0
  %v804 = vadd.f32 0.0, %v803
  %v805 = vpop.f32.mrb[0].mxu0
  %806 = vmatprep.mubr.bf16.mxu0 0
  %807 = vmatmul.mubr.bf16.gmra.mrb[0].mxu0 %v133
  %v808 = vpop.f32.mrb[0].mxu0
  %v809 = vadd.f32 0.0, %v808
  %v810 = vpop.f32.mrb[0].mxu0
  %v811 = vpop.f32.mrb[0].mxu0
  %v812 = vadd.f32 0.0, %v811
  %v813 = vpop.f32.mrb[0].mxu0
  %814 = vmatprep.mubr.bf16.mxu0 0
  %815 = vmatmul.mubr.bf16.gmra.mrb[0].mxu0 %v136
  %v816 = vpop.f32.mrb[0].mxu0
  %v817 = vadd.f32 0.0, %v816
  %v818 = vpop.f32.mrb[0].mxu0
  %v819 = vpop.f32.mrb[0].mxu0
  %v820 = vadd.f32 0.0, %v819
  %v821 = vpop.f32.mrb[0].mxu0
  %822 = vmatprep.mubr.bf16.mxu0 0
  %823 = vmatmul.mubr.bf16.gmra.mrb[0].mxu0 %v139
  %v824 = vpop.f32.mrb[0].mxu0
  %v825 = vadd.f32 0.0, %v824
  %v826 = vpop.f32.mrb[0].mxu0
  %v827 = vpop.f32.mrb[0].mxu0
  %v828 = vadd.f32 0.0, %v827
  %v829 = vpop.f32.mrb[0].mxu0
  %830 = vmatprep.mubr.bf16.mxu0 0
  %831 = vmatmul.mubr.bf16.gmra.mrb[0].mxu0 %v142
  %v832 = vpop.f32.mrb[0].mxu0
  %v833 = vadd.f32 0.0, %v832
  %v834 = vpop.f32.mrb[0].mxu0
  %v835 = vpop.f32.mrb[0].mxu0
  %v836 = vadd.f32 0.0, %v835
  %v837 = vpop.f32.mrb[0].mxu0
  %838 = vmatprep.mubr.bf16.mxu0 0
  %839 = vmatmul.mubr.bf16.gmra.mrb[0].mxu0 %v145
  %v840 = vpop.f32.mrb[0].mxu0
  %v841 = vadd.f32 0.0, %v840
  %v842 = vpop.f32.mrb[0].mxu0
  %v843 = vpop.f32.mrb[0].mxu0
  %v844 = vadd.f32 0.0, %v843
  %v845 = vpop.f32.mrb[0].mxu0
  %846 = vmatprep.mubr.bf16.mxu0 0
  %847 = vmatmul.mubr.bf16.gmra.mrb[0].mxu0 %v148
  %v848 = vpop.f32.mrb[0].mxu0
  %v849 = vadd.f32 0.0, %v848
  %v850 = vpop.f32.mrb[0].mxu0
  %v851 = vpop.f32.mrb[0].mxu0
  %v852 = vadd.f32 0.0, %v851
  %v853 = vpop.f32.mrb[0].mxu0
  %854 = vmatprep.mubr.bf16.mxu0 0
  %855 = vmatmul.mubr.bf16.gmra.mrb[0].mxu0 %v151
  %v856 = vpop.f32.mrb[0].mxu0
  %v857 = vadd.f32 0.0, %v856
  %v858 = vpop.f32.mrb[0].mxu0
  %v859 = vpop.f32.mrb[0].mxu0
  %v860 = vadd.f32 0.0, %v859
  %v861 = vpop.f32.mrb[0].mxu0
  %862 = vmatprep.mubr.bf16.mxu0 0
  %863 = vmatmul.mubr.bf16.gmra.mrb[0].mxu0 %v154
  %v864 = vpop.f32.mrb[0].mxu0
  %v865 = vadd.f32 0.0, %v864
  %v866 = vpop.f32.mrb[0].mxu0
  %v867 = vpop.f32.mrb[0].mxu0
  %v868 = vadd.f32 0.0, %v867
  %v869 = vpop.f32.mrb[0].mxu0
  %870 = vmatprep.mubr.bf16.mxu0 0
  %871 = vmatmul.mubr.bf16.gmra.mrb[0].mxu0 %v157
  %v872 = vpop.f32.mrb[0].mxu0
  %v873 = vadd.f32 0.0, %v872
  %v874 = vpop.f32.mrb[0].mxu0
  %v875 = vpop.f32.mrb[0].mxu0
  %v876 = vadd.f32 0.0, %v875
  %v877 = vpop.f32.mrb[0].mxu0
  %878 = vmatprep.mubr.bf16.mxu0 0
  %879 = vmatmul.mubr.bf16.gmra.mrb[0].mxu0 %v160
  %v880 = vpop.f32.mrb[0].mxu0
  %v881 = vadd.f32 0.0, %v880
  %v882 = vpop.f32.mrb[0].mxu0
  %v883 = vpop.f32.mrb[0].mxu0
  %v884 = vadd.f32 0.0, %v883
  %v885 = vpop.f32.mrb[0].mxu0
  %886 = vmatprep.mubr.bf16.mxu0 0
  %887 = vmatmul.mubr.bf16.gmra.mrb[0].mxu0 %v163
  %v888 = vpop.f32.mrb[0].mxu0
  %v889 = vadd.f32 0.0, %v888
  %v890 = vpop.f32.mrb[0].mxu0
  %v891 = vpop.f32.mrb[0].mxu0
  %v892 = vadd.f32 0.0, %v891
  %v893 = vpop.f32.mrb[0].mxu0
  %894 = vdwg.mxu0
  %vm919 = vcmask 1044480
  %v920 = vrot.slane %v801, 3
  %v921 = vrot.slane %v804, 3
  %v922 = vsel %vm919, %v920, %v921
  %v923 = vrot.slane %v809, 3
  %v924 = vsel %vm919, %v921, %v923
  %v925 = vrot.slane %v812, 3
  %v926 = vrot.slane %v817, 3
  %v927 = vsel %vm919, %v925, %v926
  %v928 = vrot.slane %v820, 3
  %v929 = vsel %vm919, %v926, %v928
  %v930 = vrot.slane %v825, 3
  %v931 = vrot.slane %v828, 3
  %v932 = vsel %vm919, %v930, %v931
  %v933 = vrot.slane %v833, 3
  %v934 = vsel %vm919, %v931, %v933
  %v935 = vrot.slane %v836, 3
  %v936 = vrot.slane %v841, 3
  %v937 = vsel %vm919, %v935, %v936
  %v938 = vrot.slane %v844, 3
  %v939 = vsel %vm919, %v936, %v938
  %v940 = vrot.slane %v849, 3
  %v941 = vrot.slane %v852, 3
  %v942 = vsel %vm919, %v940, %v941
  %v943 = vrot.slane %v857, 3
  %v944 = vsel %vm919, %v941, %v943
  %v945 = vrot.slane %v860, 3
  %v946 = vrot.slane %v865, 3
  %v947 = vsel %vm919, %v945, %v946
  %v948 = vrot.slane %v868, 3
  %v949 = vsel %vm919, %v946, %v948
  %v950 = vrot.slane %v873, 3
  %v951 = vrot.slane %v876, 3
  %v952 = vsel %vm919, %v950, %v951
  %v953 = vrot.slane %v881, 3
  %v954 = vsel %vm919, %v951, %v953
  %v955 = vrot.slane %v884, 3
  %v956 = vrot.slane %v889, 3
  %v957 = vsel %vm919, %v955, %v956
  %v958 = vrot.slane %v892, 3
  %v959 = vsel %vm919, %v956, %v958
  %v976 = vadd.f32 %v742, %v922
  %v977 = vadd.f32 %v743, %v924
  %v978 = vadd.f32 %v744, %v927
  %v979 = vadd.f32 %v745, %v929
  %v980 = vadd.f32 %v746, %v932
  %v981 = vadd.f32 %v747, %v934
  %v982 = vadd.f32 %v748, %v937
  %v983 = vadd.f32 %v749, %v939
  %v984 = vadd.f32 %v750, %v942
  %v985 = vadd.f32 %v751, %v944
  %v986 = vadd.f32 %v752, %v947
  %v987 = vadd.f32 %v753, %v949
  %v988 = vadd.f32 %v754, %v952
  %v989 = vadd.f32 %v755, %v954
  %v990 = vadd.f32 %v756, %v957
  %v991 = vadd.f32 %v757, %v959
  %v992 = vld [vmem:[%s2] sm:$0x1]
  %v994 = vlaneseq
  %v995 = vshrl.u32 %v994, 7
  %v996 = vsub.s32 0, %v995
  %v997 = vrot.slane %v992, %v996
  %v999 = vadd.f32 %v976, %v997
  %v1000 = vadd.f32 %v977, %v997
  %v1001 = vadd.f32 %v978, %v997
  %v1002 = vadd.f32 %v979, %v997
  %v1003 = vadd.f32 %v980, %v997
  %v1004 = vadd.f32 %v981, %v997
  %v1005 = vadd.f32 %v982, %v997
  %v1006 = vadd.f32 %v983, %v997
  %v1007 = vadd.f32 %v984, %v997
  %v1008 = vadd.f32 %v985, %v997
  %v1009 = vadd.f32 %v986, %v997
  %v1010 = vadd.f32 %v987, %v997
  %v1011 = vadd.f32 %v988, %v997
  %v1012 = vadd.f32 %v989, %v997
  %v1013 = vadd.f32 %v990, %v997
  %v1014 = vadd.f32 %v991, %v997
  %v1015 = vmax.f32 %v999, 0.0
  %v1016 = vmax.f32 %v1000, 0.0
  %v1017 = vmax.f32 %v1001, 0.0
  %v1018 = vmax.f32 %v1002, 0.0
  %v1019 = vmax.f32 %v1003, 0.0
  %v1020 = vmax.f32 %v1004, 0.0
  %v1021 = vmax.f32 %v1005, 0.0
  %v1022 = vmax.f32 %v1006, 0.0
  %v1023 = vmax.f32 %v1007, 0.0
  %v1024 = vmax.f32 %v1008, 0.0
  %v1025 = vmax.f32 %v1009, 0.0
  %v1026 = vmax.f32 %v1010, 0.0
  %v1027 = vmax.f32 %v1011, 0.0
  %v1028 = vmax.f32 %v1012, 0.0
  %v1029 = vmax.f32 %v1013, 0.0
  %v1030 = vmax.f32 %v1014, 0.0
  %v1031 = vld [vmem:[%s3] sm:$0xff]
  %v1032 = vld [vmem:[%s3 + $0x8] sm:$0xff]
  %v1033 = vmul.f32 %v1015, %v1031
  %v1034 = vmul.f32 %v1016, %v1032
  %v1035 = vmul.f32 %v1017, %v1031
  %v1036 = vmul.f32 %v1018, %v1032
  %v1037 = vmul.f32 %v1019, %v1031
  %v1038 = vmul.f32 %v1020, %v1032
  %v1039 = vmul.f32 %v1021, %v1031
  %v1040 = vmul.f32 %v1022, %v1032
  %v1041 = vmul.f32 %v1023, %v1031
  %v1042 = vmul.f32 %v1024, %v1032
  %v1043 = vmul.f32 %v1025, %v1031
  %v1044 = vmul.f32 %v1026, %v1032
  %v1045 = vmul.f32 %v1027, %v1031
  %v1046 = vmul.f32 %v1028, %v1032
  %v1047 = vmul.f32 %v1029, %v1031
  %v1048 = vmul.f32 %v1030, %v1032
  %v1049 = vmax.f32 %v1033, %v1034
  %v1050 = vrot.slane %v1049, 4
  %v1051 = vmax.f32 %v1049, %v1050
  %v1052 = vrot.slane %v1051, 2
  %v1053 = vmax.f32 %v1051, %v1052
  %v1054 = vrot.slane %v1053, 1
  %v1055 = vmax.f32 %v1053, %v1054
  %v1056 = vmax.f32 %v1035, %v1036
  %v1057 = vrot.slane %v1056, 4
  %v1058 = vmax.f32 %v1056, %v1057
  %v1059 = vrot.slane %v1058, 2
  %v1060 = vmax.f32 %v1058, %v1059
  %v1061 = vrot.slane %v1060, 1
  %v1062 = vmax.f32 %v1060, %v1061
  %v1063 = vmax.f32 %v1037, %v1038
  %v1064 = vrot.slane %v1063, 4
  %v1065 = vmax.f32 %v1063, %v1064
  %v1066 = vrot.slane %v1065, 2
  %v1067 = vmax.f32 %v1065, %v1066
  %v1068 = vrot.slane %v1067, 1
  %v1069 = vmax.f32 %v1067, %v1068
  %v1070 = vmax.f32 %v1039, %v1040
  %v1071 = vrot.slane %v1070, 4
  %v1072 = vmax.f32 %v1070, %v1071
  %v1073 = vrot.slane %v1072, 2
  %v1074 = vmax.f32 %v1072, %v1073
  %v1075 = vrot.slane %v1074, 1
  %v1076 = vmax.f32 %v1074, %v1075
  %v1077 = vmax.f32 %v1041, %v1042
  %v1078 = vrot.slane %v1077, 4
  %v1079 = vmax.f32 %v1077, %v1078
  %v1080 = vrot.slane %v1079, 2
  %v1081 = vmax.f32 %v1079, %v1080
  %v1082 = vrot.slane %v1081, 1
  %v1083 = vmax.f32 %v1081, %v1082
  %v1084 = vmax.f32 %v1043, %v1044
  %v1085 = vrot.slane %v1084, 4
  %v1086 = vmax.f32 %v1084, %v1085
  %v1087 = vrot.slane %v1086, 2
  %v1088 = vmax.f32 %v1086, %v1087
  %v1089 = vrot.slane %v1088, 1
  %v1090 = vmax.f32 %v1088, %v1089
  %v1091 = vmax.f32 %v1045, %v1046
  %v1092 = vrot.slane %v1091, 4
  %v1093 = vmax.f32 %v1091, %v1092
  %v1094 = vrot.slane %v1093, 2
  %v1095 = vmax.f32 %v1093, %v1094
  %v1096 = vrot.slane %v1095, 1
  %v1097 = vmax.f32 %v1095, %v1096
  %v1098 = vmax.f32 %v1047, %v1048
  %v1099 = vrot.slane %v1098, 4
  %v1100 = vmax.f32 %v1098, %v1099
  %v1101 = vrot.slane %v1100, 2
  %v1102 = vmax.f32 %v1100, %v1101
  %v1103 = vrot.slane %v1102, 1
  %v1104 = vmax.f32 %v1102, %v1103
  %v1105 = vpack.c.bf16 %v1055, %v1055
  %v1106 = vpack.c.bf16 %v1062, %v1062
  %v1107 = vpack.c.bf16 %v1069, %v1069
  %v1108 = vpack.c.bf16 %v1076, %v1076
  %v1109 = vpack.c.bf16 %v1083, %v1083
  %v1110 = vpack.c.bf16 %v1090, %v1090
  %v1111 = vpack.c.bf16 %v1097, %v1097
  %v1112 = vpack.c.bf16 %v1104, %v1104
  %v1113 = vld [vmem:[%s4] sm:$0xf]
  %v1114 = vld [vmem:[%s4 + $0x4] sm:$0xf]
  %v1115 = vld [vmem:[%s4 + $0x8] sm:$0xf]
  %v1116 = vld [vmem:[%s4 + $0xc] sm:$0xf]
  %v1117 = vld [vmem:[%s4 + $0x10] sm:$0xf]
  %v1118 = vld [vmem:[%s4 + $0x14] sm:$0xf]
  %v1119 = vld [vmem:[%s4 + $0x18] sm:$0xf]
  %v1120 = vld [vmem:[%s4 + $0x1c] sm:$0xf]
  %v1121 = vld [vmem:[%s4 + $0x20] sm:$0xf]
  %v1122 = vld [vmem:[%s4 + $0x24] sm:$0xf]
  %v1123 = vld [vmem:[%s4 + $0x28] sm:$0xf]
  %v1124 = vld [vmem:[%s4 + $0x2c] sm:$0xf]
  %v1125 = vld [vmem:[%s4 + $0x30] sm:$0xf]
  %v1126 = vld [vmem:[%s4 + $0x34] sm:$0xf]
  %v1127 = vld [vmem:[%s4 + $0x38] sm:$0xf]
  %v1128 = vld [vmem:[%s4 + $0x3c] sm:$0xf]
  %v1129 = vld [vmem:[%s5] sm:$0x1]
  %v1131 = vlaneseq
  %v1132 = vshrl.u32 %v1131, 7
  %v1133 = vsub.s32 0, %v1132
  %v1134 = vrot.slane %v1129, %v1133
  %v1144 = vunpack.c.l.b16 %v1105
  %v1145 = vunpack.c.l.b16 %v1106
  %v1146 = vunpack.c.l.b16 %v1107
  %v1147 = vunpack.c.l.b16 %v1108
  %v1148 = vunpack.c.l.b16 %v1109
  %v1149 = vunpack.c.l.b16 %v1110
  %v1150 = vunpack.c.l.b16 %v1111
  %v1151 = vunpack.c.l.b16 %v1112
  %vm1152 = vcmask 1041409
  %v1153 = vsel %vm1152, %v1145, %v1144
  %vm1154 = vcmask 1042434
  %v1155 = vsel %vm1154, %v1146, %v1153
  %vm1156 = vcmask 1043459
  %v1157 = vsel %vm1156, %v1147, %v1155
  %vm1158 = vcmask 1044484
  %v1159 = vsel %vm1158, %v1148, %v1157
  %vm1160 = vcmask 1045509
  %v1161 = vsel %vm1160, %v1149, %v1159
  %vm1162 = vcmask 1046534
  %v1163 = vsel %vm1162, %v1150, %v1161
  %vm1164 = vcmask 1047559
  %v1165 = vsel %vm1164, %v1151, %v1163
  %v1166 = vpack.c.b16 %v1165, %v1165
  %v1184 = vunpack.c.l.b16 %v1113
  %v1185 = vunpack.c.l.b16 %v1114
  %v1186 = vunpack.c.l.b16 %v1115
  %v1187 = vunpack.c.l.b16 %v1116
  %v1188 = vunpack.c.l.b16 %v1117
  %v1189 = vunpack.c.l.b16 %v1118
  %v1190 = vunpack.c.l.b16 %v1119
  %v1191 = vunpack.c.l.b16 %v1120
  %v1192 = vunpack.c.l.b16 %v1121
  %v1193 = vunpack.c.l.b16 %v1122
  %v1194 = vunpack.c.l.b16 %v1123
  %v1195 = vunpack.c.l.b16 %v1124
  %v1196 = vunpack.c.l.b16 %v1125
  %v1197 = vunpack.c.l.b16 %v1126
  %v1198 = vunpack.c.l.b16 %v1127
  %v1199 = vunpack.c.l.b16 %v1128
  %v1200 = vpack.c.b16 %v1185, %v1184
  %v1201 = vpack.c.b16 %v1187, %v1186
  %v1202 = vpack.c.b16 %v1189, %v1188
  %v1203 = vpack.c.b16 %v1191, %v1190
  %v1204 = vpack.c.b16 %v1193, %v1192
  %v1205 = vpack.c.b16 %v1195, %v1194
  %v1206 = vpack.c.b16 %v1197, %v1196
  %v1207 = vpack.c.b16 %v1199, %v1198
  %1216 = vmatprep.subr.bf16.mxu0 0
  %1217 = vmatpush1.bf16.msra.mxu0 %v1200
  %1218 = vmatprep.subr.bf16.mxu0 0
  %1219 = vmatpush1.bf16.msra.mxu0 %v1201
  %1220 = vmatprep.subr.bf16.mxu0 0
  %1221 = vmatpush1.bf16.msra.mxu0 %v1202
  %1222 = vmatprep.subr.bf16.mxu0 0
  %1223 = vmatpush1.bf16.msra.mxu0 %v1203
  %1224 = vmatprep.subr.bf16.mxu0 0
  %1225 = vmatpush1.bf16.msra.mxu0 %v1204
  %1226 = vmatprep.subr.bf16.mxu0 0
  %1227 = vmatpush1.bf16.msra.mxu0 %v1205
  %1228 = vmatprep.subr.bf16.mxu0 0
  %1229 = vmatpush1.bf16.msra.mxu0 %v1206
  %1230 = vmatprep.subr.bf16.mxu0 0
  %1231 = vmatpush1.bf16.msra.mxu0 %v1207
  %1232 = vmatprep.subr.bf16.mxu0 0
  %1233 = vmatpush1.bf16.msra.mxu0 0
  %1234 = vmatprep.subr.bf16.mxu0 0
  %1235 = vmatpush1.bf16.msra.mxu0 0
  %1236 = vmatprep.subr.bf16.mxu0 0
  %1237 = vmatpush1.bf16.msra.mxu0 0
  %1238 = vmatprep.subr.bf16.mxu0 0
  %1239 = vmatpush1.bf16.msra.mxu0 0
  %1240 = vmatprep.subr.bf16.mxu0 0
  %1241 = vmatpush1.bf16.msra.mxu0 0
  %1242 = vmatprep.subr.bf16.mxu0 0
  %1243 = vmatpush1.bf16.msra.mxu0 0
  %1244 = vmatprep.subr.bf16.mxu0 0
  %1245 = vmatpush1.bf16.msra.mxu0 0
  %1246 = vmatprep.subr.bf16.mxu0 0
  %1247 = vmatpush1.bf16.msra.mxu0 0
  %1248 = vmatprep.mubr.bf16.mxu0 0
  %1249 = vmatmul.mubr.bf16.gmra.mrb[0].mxu0 %v1166
  %v1250 = vpop.f32.mrb[0].mxu0
  %v1251 = vadd.f32 %v1134, %v1250
  %v1252 = vpop.f32.mrb[0].mxu0
  %v1253 = vpop.f32.mrb[0].mxu0
  %v1254 = vpop.f32.mrb[0].mxu0
  %1255 = vdwg.mxu0
  %1256 = vst [vmem:[%s6] sm:$0xff] %v1251
  // Predicated region
  $region26: #{textcnn_forward.1} parent=0 // pred_check
    _
  $region27: #{textcnn_forward.1} parent=0 // pred_check_branch
    %1258 = sbr.rel (0) target = $region29
  $region28: #{textcnn_forward.1} parent=0 // pred_region
    _
  $region29: #{textcnn_forward.1} parent=0 // pred_fallthru
    _
  // Predicated region
  $region30: #{textcnn_forward.1} parent=0 // pred_check
    _
  $region31: #{textcnn_forward.1} parent=0 // pred_check_branch
    %1260 = sbr.rel (0) target = $region33
  $region32: #{textcnn_forward.1} parent=0 // pred_region
    _
  $region33: #{textcnn_forward.1} parent=0 // pred_fallthru
    _

</llo_original>
